<compile_context>
chip_gen: v7x
topology: tpu7x:2x2x1
jax: 0.10.0
libtpu: 0.0.40
codegen_flags: <defaults>
</compile_context>

<pallas_src>
import functools

import jax
import jax.numpy as jnp
from jax import lax
from jax.experimental import pallas as pl
from jax.experimental.pallas import tpu as pltpu


# ---------------------------------------------------------------------------
# helpers (parameter bookkeeping, matches timm.make_divisible)
# ---------------------------------------------------------------------------
def make_divisible(v, divisor=8, min_value=None, round_limit=0.9):
    min_value = min_value or divisor
    new_v = max(min_value, int(v + divisor / 2) // divisor * divisor)
    if new_v < round_limit * v:
        new_v += divisor
    return new_v


def _largest_divisor_leq(n, cap):
    for d in range(min(n, cap), 0, -1):
        if n % d == 0:
            return d
    return 1


def _round_up(n, m):
    return ((n + m - 1) // m) * m


# ---------------------------------------------------------------------------
# Pallas kernel: grid = (batch groups, spatial tiles)
# ---------------------------------------------------------------------------
def _gca_kernel(x_ref, wattn_ref, w1t_ref, b1_ref, gamma_ref, beta_ref,
                w2t_ref, b2_ref, o_ref, m_sc, l_sc, acc_sc,
                *, hw_valid, hw_tile, mask_tail):
    # x_ref:     (Bt, C, HWt)  native dtype (f32 / bf16)
    # wattn_ref: (C, 1)  f32   conv_attn weight (bias dropped: shift-invariant)
    # w1t_ref:   (C, RD) f32   b1/gamma/beta: (1, RD) f32
    # w2t_ref:   (RD, C) f32   b2_ref: (1, C) f32
    # o_ref:     (Bt, 1, C) f32
    # scratch:   m_sc (Bt,1,1)  l_sc (Bt,1,1)  acc_sc (Bt,C,1)   all f32
    t = pl.program_id(1)

    @pl.when(t == 0)
    def _init():
        m_sc[...] = jnp.full_like(m_sc, -jnp.inf)
        l_sc[...] = jnp.zeros_like(l_sc)
        acc_sc[...] = jnp.zeros_like(acc_sc)

    xb = x_ref[...]                                       # (Bt, C, HWt)

    # ---- attention logits on the VPU: one MAC per loaded x element ---------
    # wattn splats along lanes (per-sublane scalar); reduce over the C axis.
    w = wattn_ref[...][None]                              # (1, C, 1) f32
    logits = jnp.sum(xb.astype(jnp.float32) * w, axis=1,
                     keepdims=True)                       # (Bt, 1, HWt) f32

    # ---- online softmax over the spatial axis ------------------------------
    m_prev = m_sc[...]                                    # (Bt, 1, 1)
    m_new = jnp.maximum(m_prev, jnp.max(logits, axis=-1, keepdims=True))
    alpha = jnp.exp(m_prev - m_new)                       # (Bt, 1, 1)
    p = jnp.exp(logits - m_new)                           # (Bt, 1, HWt) f32
    if mask_tail:
        pos = t * hw_tile + lax.broadcasted_iota(jnp.int32, p.shape, 2)
        p = jnp.where(pos < hw_valid, p, 0.0)
    l_sc[...] = alpha * l_sc[...] + jnp.sum(p, axis=-1, keepdims=True)

    # ---- context: x is the streamed MXU LHS, p is the tiny stationary RHS --
    ctx_t = lax.dot_general(xb, p.astype(xb.dtype),
                            (((2,), (2,)), ((0,), (0,))),
                            preferred_element_type=jnp.float32)   # (Bt, C, 1)
    acc_sc[...] = alpha * acc_sc[...] + ctx_t
    m_sc[...] = m_new

    # ---- last spatial tile: normalize + ConvMlp (fc1 -> LN -> ReLU -> fc2) -
    @pl.when(t == pl.num_programs(1) - 1)
    def _finalize():
        inv_l = pl.reciprocal(l_sc[...][:, :, 0], approx=False)    # (Bt, 1)
        # single relayout from the dot-native (Bt, C, 1) to lane-dense (Bt, C)
        context = acc_sc[...][:, :, 0] * inv_l                     # (Bt, C)

        h = jnp.dot(context, w1t_ref[...],
                    preferred_element_type=jnp.float32) + b1_ref[...]   # (Bt, RD)
        mu = jnp.mean(h, axis=-1, keepdims=True)
        var = jnp.mean(jnp.square(h - mu), axis=-1, keepdims=True)
        hn = (h - mu) * lax.rsqrt(var + 1e-5)
        hn = hn * gamma_ref[...] + beta_ref[...]
        hn = jnp.maximum(hn, 0.0)

        out = jnp.dot(hn, w2t_ref[...],
                      preferred_element_type=jnp.float32) + b2_ref[...]  # (Bt, C)
        o_ref[...] = out[:, None, :].astype(o_ref.dtype)


# ---------------------------------------------------------------------------
# wrapper
# ---------------------------------------------------------------------------
def global_context_attention(x, params, *, bt_max=8, hw_tile=None,
                             x_block_budget_bytes=None):
    B, C, H, W = x.shape
    HW = H * W
    RD = params["w1"].shape[0]
    xdt = x.dtype
    itemsize = jnp.dtype(xdt).itemsize
    f32 = jnp.float32

    # ---- generation-aware VMEM ceiling (v5e/v6e: 128 MiB, v7x: 64 MiB) -----
    try:
        vmem_cap = int(pltpu.get_tpu_info().vmem_capacity_bytes)
    except Exception:
        vmem_cap = 64 << 20            # conservative (v7x-sized) fallback
    vmem_ceiling = int(0.8 * vmem_cap)

    # ---- batch grouping: amortize the ~0.35us/step overhead, but keep >= 2
    #      steps on the "parallel" batch axis so both v7x TCs get work. ------
    Bt = _largest_divisor_leq(B, bt_max)
    if B // Bt < 2 and B >= 2:
        Bt = _largest_divisor_leq(B, max(1, B // 2))
    nb = B // Bt

    weight_bytes = 4 * (2 * C + 2 * C * RD + 3 * RD)

    if x_block_budget_bytes is None:
        x_block_budget_bytes = (vmem_ceiling - 2 * weight_bytes
                                - 8 * Bt * C - 4 * Bt * (C + 2) - (6 << 20))
        x_block_budget_bytes = int(min(max(2 << 20, x_block_budget_bytes),
                                       64 << 20))

    # ---- spatial tiling: multiple-of-128 tiles; pad HW, mask the tail ------
    if hw_tile is not None:
        if hw_tile != HW and hw_tile % 128 != 0:
            raise ValueError("hw_tile must equal H*W or be a multiple of 128")
        HWt = hw_tile
        HW_pad = _round_up(HW, HWt)
    else:
        if 2 * Bt * C * HW * itemsize <= x_block_budget_bytes:
            HWt, HW_pad = HW, HW        # whole spatial extent in one block
        else:
            HW_pad = _round_up(HW, 128)
            cap = max(128, (x_block_budget_bytes
                            // (2 * Bt * C * itemsize)) // 128 * 128)
            HWt, t = 128, 128
            while t <= min(cap, HW_pad):
                if HW_pad % t == 0:
                    HWt = t
                t += 128
    nt = HW_pad // HWt
    mask_tail = HW_pad != HW

    x_flat = x.reshape(B, C, HW)
    if mask_tail:
        # TODO(synk): this pad is one extra HBM pass over x; a ragged
        # (BoundedSlice) tail block would avoid it.
        x_flat = jnp.pad(x_flat, ((0, 0), (0, 0), (0, HW_pad - HW)))

    wattn = params["wattn"].reshape(C, 1).astype(f32)    # conv_attn weight
    # conv_attn bias ("battn") intentionally unused: softmax is shift-invariant.
    w1t = params["w1"].reshape(RD, C).T.astype(f32)      # (C, RD)
    b1 = params["b1"].reshape(1, RD).astype(f32)
    gamma = params["ln_gamma"].reshape(1, RD).astype(f32)
    beta = params["ln_beta"].reshape(1, RD).astype(f32)
    w2t = params["w2"].reshape(C, RD).T.astype(f32)      # (RD, C)
    b2 = params["b2"].reshape(1, C).astype(f32)

    vmem_need = (2 * Bt * C * HWt * itemsize             # double-buffered x
                 + 2 * weight_bytes                      # params
                 + 4 * Bt * (C + 2)                      # online-softmax scratch
                 + 2 * 4 * Bt * C                        # output block
                 + (4 << 20))                            # compiler headroom
    vmem_limit = int(min(vmem_ceiling, max(16 << 20, vmem_need)))

    cost = pl.CostEstimate(
        flops=int(4 * B * HW_pad * C + 4 * B * C * RD),
        transcendentals=int(B * HW_pad),
        bytes_accessed=int(B * C * HW_pad * itemsize + weight_bytes + 4 * B * C),
    )

    kernel = functools.partial(_gca_kernel, hw_valid=HW, hw_tile=HWt,
                               mask_tail=mask_tail)

    out = pl.pallas_call(
        kernel,
        out_shape=jax.ShapeDtypeStruct((B, 1, C), jnp.float32),
        grid_spec=pltpu.PrefetchScalarGridSpec(
            num_scalar_prefetch=0,
            grid=(nb, nt),
            in_specs=[
                pl.BlockSpec((Bt, C, HWt), lambda b, t: (b, 0, t)),  # x tile
                pl.BlockSpec((C, 1), lambda b, t: (0, 0)),           # conv_attn w
                pl.BlockSpec((C, RD), lambda b, t: (0, 0)),          # fc1 w^T
                pl.BlockSpec((1, RD), lambda b, t: (0, 0)),          # fc1 bias
                pl.BlockSpec((1, RD), lambda b, t: (0, 0)),          # LN gamma
                pl.BlockSpec((1, RD), lambda b, t: (0, 0)),          # LN beta
                pl.BlockSpec((RD, C), lambda b, t: (0, 0)),          # fc2 w^T
                pl.BlockSpec((1, C), lambda b, t: (0, 0)),           # fc2 bias
            ],
            out_specs=pl.BlockSpec((Bt, 1, C), lambda b, t: (b, 0, 0)),
            scratch_shapes=[
                pltpu.VMEM((Bt, 1, 1), jnp.float32),   # running max
                pltpu.VMEM((Bt, 1, 1), jnp.float32),   # running denominator
                pltpu.VMEM((Bt, C, 1), jnp.float32),   # running context (dot layout)
            ],
        ),
        compiler_params=pltpu.CompilerParams(
            dimension_semantics=("parallel", "arbitrary"),
            vmem_limit_bytes=vmem_limit,
        ),
        cost_estimate=cost,
    )(x_flat, wattn, w1t, b1, gamma, beta, w2t, b2)

    return out.reshape(B, C, 1, 1)


# ---------------------------------------------------------------------------
# deterministic parameter init (shapes from the module's __init__)
# ---------------------------------------------------------------------------
def init_params(key, channels, rd_ratio=1.0 / 8, rd_divisor=1):
    rd = make_divisible(channels * rd_ratio, rd_divisor, round_limit=0.0)
    ks = jax.random.split(key, 6)
    wattn = jax.random.normal(ks[0], (1, channels, 1, 1), jnp.float32) * (2.0 / channels) ** 0.5
    battn = jax.random.uniform(ks[1], (1,), jnp.float32,
                               -1.0 / channels ** 0.5, 1.0 / channels ** 0.5)
    w1 = jax.random.normal(ks[2], (rd, channels, 1, 1), jnp.float32) * (2.0 / channels) ** 0.5
    b1 = jax.random.uniform(ks[3], (rd,), jnp.float32,
                            -1.0 / channels ** 0.5, 1.0 / channels ** 0.5)
    w2 = jax.random.normal(ks[4], (channels, rd, 1, 1), jnp.float32) * (2.0 / rd) ** 0.5
    b2 = jax.random.uniform(ks[5], (channels,), jnp.float32,
                            -1.0 / rd ** 0.5, 1.0 / rd ** 0.5)
    return {
        "wattn": wattn, "battn": battn,
        "w1": w1, "b1": b1,
        "ln_gamma": jnp.ones((rd,), jnp.float32),
        "ln_beta": jnp.zeros((rd,), jnp.float32),
        "w2": w2, "b2": b2,
    }


# ---------------------------------------------------------------------------
# pure-JAX reference (mirrors the PyTorch forward, bias included)
# ---------------------------------------------------------------------------
def reference(x, params):
    B, C, H, W = x.shape
    RD = params["w1"].shape[0]
    wattn = params["wattn"].reshape(1, C)
    logits = jnp.einsum("bcp,oc->bop", x.reshape(B, C, H * W), wattn)
    logits = logits + params["battn"].reshape(1, 1, 1)
    attn = jax.nn.softmax(logits, axis=-1)[..., None]                 # (B,1,HW,1)
    context = (x.reshape(B, C, H * W)[:, None] @ attn).reshape(B, C)  # (B, C)
    h = context @ params["w1"].reshape(RD, C).T + params["b1"].reshape(1, RD)
    mu = h.mean(-1, keepdims=True)
    var = ((h - mu) ** 2).mean(-1, keepdims=True)
    hn = (h - mu) / jnp.sqrt(var + 1e-5)
    hn = hn * params["ln_gamma"].reshape(1, RD) + params["ln_beta"].reshape(1, RD)
    hn = jnp.maximum(hn, 0.0)
    out = hn @ params["w2"].reshape(C, RD).T + params["b2"].reshape(1, C)
    return out.reshape(B, C, 1, 1)


if __name__ == "__main__":
    key = jax.random.PRNGKey(0)
    kx, kp, kx2, kx3 = jax.random.split(key, 4)

    # ---- test 1: f32, single spatial tile ----------------------------------
    B, C, H, W = 2, 32, 16, 16                 # rd_channels = 4
    x = jax.random.normal(kx, (B, C, H, W), jnp.float32)
    params = init_params(kp, C)
    out = jax.block_until_ready(global_context_attention(x, params))
    ref = reference(x, params)
    assert out.shape == (B, C, 1, 1)
    assert jnp.allclose(out, ref, rtol=1e-4, atol=1e-5), "f32 single-tile mismatch"

    # ---- test 2: f32, tiled spatial axis (online softmax across 4 tiles) ---
    B2, C2, H2, W2 = 4, 32, 32, 32             # HW = 1024 -> 4 tiles of 256
    x2 = jax.random.normal(kx2, (B2, C2, H2, W2), jnp.float32)
    params2 = init_params(kp, C2)
    out2 = jax.block_until_ready(
        global_context_attention(x2, params2, hw_tile=256))
    ref2 = reference(x2, params2)
    assert jnp.allclose(out2, ref2, rtol=1e-4, atol=1e-5), "multi-tile mismatch"

    # ---- test 3: HW not a multiple of 128 -> padded + masked tail tile -----
    B3, C3, H3, W3 = 2, 32, 14, 14             # HW = 196 -> padded to 256
    x3 = jax.random.normal(kx3, (B3, C3, H3, W3), jnp.float32)
    params3 = init_params(kp, C3)
    out3 = jax.block_until_ready(
        global_context_attention(x3, params3, hw_tile=128))
    ref3 = reference(x3, params3)
    assert jnp.allclose(out3, ref3, rtol=1e-4, atol=1e-5), "padded-tail mismatch"

    # ---- test 4: bf16 x stream (halved HBM traffic), tiled spatial axis ----
    x2_bf = x2.astype(jnp.bfloat16)
    out_bf = jax.block_until_ready(
        global_context_attention(x2_bf, params2, hw_tile=256))
    ref_bf = reference(x2_bf.astype(jnp.float32), params2)
    assert jnp.allclose(out_bf, ref_bf, rtol=5e-2, atol=5e-2), "bf16 mismatch"

    print("KERNEL_OK")
</pallas_src>

<mosaic_0001>
module attributes {stable_mosaic.version = 11 : i64} {
  func.func @_gca_kernel(%arg0: i32, %arg1: i32, %arg2: memref<1x32x256xf32, #tpu.memory_space<vmem>>, %arg3: memref<32x1xf32, #tpu.memory_space<vmem>>, %arg4: memref<32x4xf32, #tpu.memory_space<vmem>>, %arg5: memref<1x4xf32, #tpu.memory_space<vmem>>, %arg6: memref<1x4xf32, #tpu.memory_space<vmem>>, %arg7: memref<1x4xf32, #tpu.memory_space<vmem>>, %arg8: memref<4x32xf32, #tpu.memory_space<vmem>>, %arg9: memref<1x32xf32, #tpu.memory_space<vmem>>, %arg10: memref<1x1x32xf32, #tpu.memory_space<vmem>>, %arg11: memref<1x1x1xf32, #tpu.memory_space<vmem>>, %arg12: memref<1x1x1xf32, #tpu.memory_space<vmem>>, %arg13: memref<1x32x1xf32, #tpu.memory_space<vmem>>) attributes {dimension_semantics = [#tpu.dimension_semantics<parallel>, #tpu.dimension_semantics<arbitrary>], iteration_bounds = array<i64: 2, 1>, scalar_prefetch = 0 : i64, scratch_operands = 3 : i64, tpu.core_type = #tpu.core_type<tc>, window_params = [{transform_indices = @transform_0, window_bounds = array<i64: 1, 32, 256>}, {pipeline_mode = #tpu.pipeline_mode<synchronous>, transform_indices = @transform_1, window_bounds = array<i64: 32, 1>}, {pipeline_mode = #tpu.pipeline_mode<synchronous>, transform_indices = @transform_2, window_bounds = array<i64: 32, 4>}, {pipeline_mode = #tpu.pipeline_mode<synchronous>, transform_indices = @transform_3, window_bounds = array<i64: 1, 4>}, {pipeline_mode = #tpu.pipeline_mode<synchronous>, transform_indices = @transform_4, window_bounds = array<i64: 1, 4>}, {pipeline_mode = #tpu.pipeline_mode<synchronous>, transform_indices = @transform_5, window_bounds = array<i64: 1, 4>}, {pipeline_mode = #tpu.pipeline_mode<synchronous>, transform_indices = @transform_6, window_bounds = array<i64: 4, 32>}, {pipeline_mode = #tpu.pipeline_mode<synchronous>, transform_indices = @transform_7, window_bounds = array<i64: 1, 32>}, {transform_indices = @transform_8, window_bounds = array<i64: 1, 1, 32>}]} {
    %c0_i32 = arith.constant 0 : i32
    %0 = arith.cmpi eq, %arg1, %c0_i32 : i32
    %1 = arith.extui %0 : i1 to i32
    %c0_i32_0 = arith.constant 0 : i32
    %2 = arith.cmpi ne, %1, %c0_i32_0 : i32
    scf.if %2 {
      %cst_28 = arith.constant 0xFF800000 : f32
      %35 = vector.broadcast %cst_28 : f32 to vector<1x1x1xf32>
      %c0_29 = arith.constant 0 : index
      %c0_30 = arith.constant 0 : index
      %c0_31 = arith.constant 0 : index
      %36 = vector.load %arg11[%c0_29, %c0_30, %c0_31] : memref<1x1x1xf32, #tpu.memory_space<vmem>>, vector<1x1x1xf32>
      tpu.vector_store %arg11[%c0_29, %c0_30, %c0_31], %35 {strides = array<i32>} : memref<1x1x1xf32, #tpu.memory_space<vmem>>, vector<1x1x1xf32>,
      %cst_32 = arith.constant 0.000000e+00 : f32
      %37 = vector.broadcast %cst_32 : f32 to vector<1x1x1xf32>
      %c0_33 = arith.constant 0 : index
      %c0_34 = arith.constant 0 : index
      %c0_35 = arith.constant 0 : index
      %38 = vector.load %arg12[%c0_33, %c0_34, %c0_35] : memref<1x1x1xf32, #tpu.memory_space<vmem>>, vector<1x1x1xf32>
      tpu.vector_store %arg12[%c0_33, %c0_34, %c0_35], %37 {strides = array<i32>} : memref<1x1x1xf32, #tpu.memory_space<vmem>>, vector<1x1x1xf32>,
      %cst_36 = arith.constant 0.000000e+00 : f32
      %39 = vector.broadcast %cst_36 : f32 to vector<1x32x1xf32>
      %c0_37 = arith.constant 0 : index
      %c0_38 = arith.constant 0 : index
      %c0_39 = arith.constant 0 : index
      %40 = vector.load %arg13[%c0_37, %c0_38, %c0_39] : memref<1x32x1xf32, #tpu.memory_space<vmem>>, vector<1x32x1xf32>
      tpu.vector_store %arg13[%c0_37, %c0_38, %c0_39], %39 {strides = array<i32>} : memref<1x32x1xf32, #tpu.memory_space<vmem>>, vector<1x32x1xf32>,
    } else {
    }
    %c0 = arith.constant 0 : index
    %c0_1 = arith.constant 0 : index
    %c0_2 = arith.constant 0 : index
    %3 = vector.load %arg2[%c0, %c0_1, %c0_2] : memref<1x32x256xf32, #tpu.memory_space<vmem>>, vector<1x32x256xf32>
    %c0_3 = arith.constant 0 : index
    %c0_4 = arith.constant 0 : index
    %4 = vector.load %arg3[%c0_3, %c0_4] : memref<32x1xf32, #tpu.memory_space<vmem>>, vector<32x1xf32>
    %5 = vector.shape_cast %4 : vector<32x1xf32> to vector<1x32x1xf32>
    %6 = vector.broadcast %5 : vector<1x32x1xf32> to vector<1x32x256xf32>
    %7 = arith.mulf %3, %6 : vector<1x32x256xf32>
    %cst = arith.constant dense<0.000000e+00> : vector<1x256xf32>
    %8 = vector.multi_reduction <add>, %7, %cst [1] : vector<1x32x256xf32> to vector<1x256xf32>
    %9 = vector.shape_cast %8 : vector<1x256xf32> to vector<1x1x256xf32>
    %c0_5 = arith.constant 0 : index
    %c0_6 = arith.constant 0 : index
    %c0_7 = arith.constant 0 : index
    %10 = vector.load %arg11[%c0_5, %c0_6, %c0_7] : memref<1x1x1xf32, #tpu.memory_space<vmem>>, vector<1x1x1xf32>
    %cst_8 = arith.constant dense<0xFF800000> : vector<1x1xf32>
    %11 = vector.multi_reduction <maximumf>, %9, %cst_8 [2] : vector<1x1x256xf32> to vector<1x1xf32>
    %12 = vector.shape_cast %11 : vector<1x1xf32> to vector<1x1x1xf32>
    %13 = arith.maximumf %10, %12 : vector<1x1x1xf32>
    %14 = arith.subf %10, %13 : vector<1x1x1xf32>
    %15 = math.exp %14 : vector<1x1x1xf32>
    %16 = vector.broadcast %13 : vector<1x1x1xf32> to vector<1x1x256xf32>
    %17 = arith.subf %9, %16 : vector<1x1x256xf32>
    %18 = math.exp %17 : vector<1x1x256xf32>
    %c0_9 = arith.constant 0 : index
    %c0_10 = arith.constant 0 : index
    %c0_11 = arith.constant 0 : index
    %19 = vector.load %arg12[%c0_9, %c0_10, %c0_11] : memref<1x1x1xf32, #tpu.memory_space<vmem>>, vector<1x1x1xf32>
    %20 = arith.mulf %15, %19 : vector<1x1x1xf32>
    %cst_12 = arith.constant dense<0.000000e+00> : vector<1x1xf32>
    %21 = vector.multi_reduction <add>, %18, %cst_12 [2] : vector<1x1x256xf32> to vector<1x1xf32>
    %22 = vector.shape_cast %21 : vector<1x1xf32> to vector<1x1x1xf32>
    %23 = arith.addf %20, %22 : vector<1x1x1xf32>
    %c0_13 = arith.constant 0 : index
    %c0_14 = arith.constant 0 : index
    %c0_15 = arith.constant 0 : index
    %24 = vector.load %arg12[%c0_13, %c0_14, %c0_15] : memref<1x1x1xf32, #tpu.memory_space<vmem>>, vector<1x1x1xf32>
    tpu.vector_store %arg12[%c0_13, %c0_14, %c0_15], %23 {strides = array<i32>} : memref<1x1x1xf32, #tpu.memory_space<vmem>>, vector<1x1x1xf32>,
    %cst_16 = arith.constant dense<0.000000e+00> : vector<1x32x1xf32>
    %25 = tpu.matmul %3, %18, %cst_16 {dimension_numbers = #tpu.dot_dimension_numbers<[2], [2], [1], [1], [0, 0, 0, 1, 1, 1], [0], [0]>} : vector<1x32x256xf32>, vector<1x1x256xf32>, vector<1x32x1xf32> -> vector<1x32x1xf32>
    %c0_17 = arith.constant 0 : index
    %c0_18 = arith.constant 0 : index
    %c0_19 = arith.constant 0 : index
    %26 = vector.load %arg13[%c0_17, %c0_18, %c0_19] : memref<1x32x1xf32, #tpu.memory_space<vmem>>, vector<1x32x1xf32>
    %27 = vector.broadcast %15 : vector<1x1x1xf32> to vector<1x32x1xf32>
    %28 = arith.mulf %27, %26 : vector<1x32x1xf32>
    %29 = arith.addf %28, %25 : vector<1x32x1xf32>
    %c0_20 = arith.constant 0 : index
    %c0_21 = arith.constant 0 : index
    %c0_22 = arith.constant 0 : index
    %30 = vector.load %arg13[%c0_20, %c0_21, %c0_22] : memref<1x32x1xf32, #tpu.memory_space<vmem>>, vector<1x32x1xf32>
    tpu.vector_store %arg13[%c0_20, %c0_21, %c0_22], %29 {strides = array<i32>} : memref<1x32x1xf32, #tpu.memory_space<vmem>>, vector<1x32x1xf32>,
    %c0_23 = arith.constant 0 : index
    %c0_24 = arith.constant 0 : index
    %c0_25 = arith.constant 0 : index
    %31 = vector.load %arg11[%c0_23, %c0_24, %c0_25] : memref<1x1x1xf32, #tpu.memory_space<vmem>>, vector<1x1x1xf32>
    tpu.vector_store %arg11[%c0_23, %c0_24, %c0_25], %13 {strides = array<i32>} : memref<1x1x1xf32, #tpu.memory_space<vmem>>, vector<1x1x1xf32>,
    %c0_i32_26 = arith.constant 0 : i32
    %32 = arith.cmpi eq, %arg1, %c0_i32_26 : i32
    %33 = arith.extui %32 : i1 to i32
    %c0_i32_27 = arith.constant 0 : i32
    %34 = arith.cmpi ne, %33, %c0_i32_27 : i32
    scf.if %34 {
      %c0_28 = arith.constant 0 : index
      %c0_29 = arith.constant 0 : index
      %c0_30 = arith.constant 0 : index
      %35 = vector.load %arg12[%c0_28, %c0_29, %c0_30] : memref<1x1x1xf32, #tpu.memory_space<vmem>>, vector<1x1x1xf32>
      %36 = vector.shape_cast %35 : vector<1x1x1xf32> to vector<1x1xf32>
      %37 = tpu.reciprocal %36 : vector<1x1xf32> -> vector<1x1xf32>
      %c0_31 = arith.constant 0 : index
      %c0_32 = arith.constant 0 : index
      %c0_33 = arith.constant 0 : index
      %38 = vector.load %arg13[%c0_31, %c0_32, %c0_33] : memref<1x32x1xf32, #tpu.memory_space<vmem>>, vector<1x32x1xf32>
      %39 = vector.shape_cast %38 : vector<1x32x1xf32> to vector<1x32xf32>
      %40 = vector.broadcast %37 : vector<1x1xf32> to vector<1x32xf32>
      %41 = arith.mulf %39, %40 : vector<1x32xf32>
      %c0_34 = arith.constant 0 : index
      %c0_35 = arith.constant 0 : index
      %42 = vector.load %arg4[%c0_34, %c0_35] : memref<32x4xf32, #tpu.memory_space<vmem>>, vector<32x4xf32>
      %cst_36 = arith.constant dense<0.000000e+00> : vector<1x4xf32>
      %43 = tpu.matmul %41, %42, %cst_36 {dimension_numbers = #tpu.dot_dimension_numbers<[1], [0], [0], [1], [0, 0, 1, 1], [], []>} : vector<1x32xf32>, vector<32x4xf32>, vector<1x4xf32> -> vector<1x4xf32>
      %c0_37 = arith.constant 0 : index
      %c0_38 = arith.constant 0 : index
      %44 = vector.load %arg5[%c0_37, %c0_38] : memref<1x4xf32, #tpu.memory_space<vmem>>, vector<1x4xf32>
      %45 = arith.addf %43, %44 : vector<1x4xf32>
      %cst_39 = arith.constant dense<0.000000e+00> : vector<1xf32>
      %46 = vector.multi_reduction <add>, %45, %cst_39 [1] : vector<1x4xf32> to vector<1xf32>
      %47 = vector.shape_cast %46 : vector<1xf32> to vector<1x1xf32>
      %cst_40 = arith.constant 4.000000e+00 : f32
      %48 = vector.broadcast %cst_40 : f32 to vector<1x1xf32>
      %49 = arith.divf %47, %48 : vector<1x1xf32>
      %50 = vector.broadcast %49 : vector<1x1xf32> to vector<1x4xf32>
      %51 = arith.subf %45, %50 : vector<1x4xf32>
      %52 = arith.mulf %51, %51 : vector<1x4xf32>
      %cst_41 = arith.constant dense<0.000000e+00> : vector<1xf32>
      %53 = vector.multi_reduction <add>, %52, %cst_41 [1] : vector<1x4xf32> to vector<1xf32>
      %54 = vector.shape_cast %53 : vector<1xf32> to vector<1x1xf32>
      %cst_42 = arith.constant 4.000000e+00 : f32
      %55 = vector.broadcast %cst_42 : f32 to vector<1x1xf32>
      %56 = arith.divf %54, %55 : vector<1x1xf32>
      %57 = vector.broadcast %49 : vector<1x1xf32> to vector<1x4xf32>
      %58 = arith.subf %45, %57 : vector<1x4xf32>
      %cst_43 = arith.constant 9.99999974E-6 : f32
      %59 = vector.broadcast %cst_43 : f32 to vector<1x1xf32>
      %60 = arith.addf %56, %59 : vector<1x1xf32>
      %61 = math.rsqrt %60 : vector<1x1xf32>
      %62 = vector.broadcast %61 : vector<1x1xf32> to vector<1x4xf32>
      %63 = arith.mulf %58, %62 : vector<1x4xf32>
      %c0_44 = arith.constant 0 : index
      %c0_45 = arith.constant 0 : index
      %64 = vector.load %arg6[%c0_44, %c0_45] : memref<1x4xf32, #tpu.memory_space<vmem>>, vector<1x4xf32>
      %65 = arith.mulf %63, %64 : vector<1x4xf32>
      %c0_46 = arith.constant 0 : index
      %c0_47 = arith.constant 0 : index
      %66 = vector.load %arg7[%c0_46, %c0_47] : memref<1x4xf32, #tpu.memory_space<vmem>>, vector<1x4xf32>
      %67 = arith.addf %65, %66 : vector<1x4xf32>
      %cst_48 = arith.constant 0.000000e+00 : f32
      %68 = vector.broadcast %cst_48 : f32 to vector<1x4xf32>
      %69 = arith.maximumf %67, %68 : vector<1x4xf32>
      %c0_49 = arith.constant 0 : index
      %c0_50 = arith.constant 0 : index
      %70 = vector.load %arg8[%c0_49, %c0_50] : memref<4x32xf32, #tpu.memory_space<vmem>>, vector<4x32xf32>
      %cst_51 = arith.constant dense<0.000000e+00> : vector<1x32xf32>
      %71 = tpu.matmul %69, %70, %cst_51 {dimension_numbers = #tpu.dot_dimension_numbers<[1], [0], [0], [1], [0, 0, 1, 1], [], []>} : vector<1x4xf32>, vector<4x32xf32>, vector<1x32xf32> -> vector<1x32xf32>
      %c0_52 = arith.constant 0 : index
      %c0_53 = arith.constant 0 : index
      %72 = vector.load %arg9[%c0_52, %c0_53] : memref<1x32xf32, #tpu.memory_space<vmem>>, vector<1x32xf32>
      %73 = arith.addf %71, %72 : vector<1x32xf32>
      %74 = vector.shape_cast %73 : vector<1x32xf32> to vector<1x1x32xf32>
      %c0_54 = arith.constant 0 : index
      %c0_55 = arith.constant 0 : index
      %c0_56 = arith.constant 0 : index
      %75 = vector.load %arg10[%c0_54, %c0_55, %c0_56] : memref<1x1x32xf32, #tpu.memory_space<vmem>>, vector<1x1x32xf32>
      tpu.vector_store %arg10[%c0_54, %c0_55, %c0_56], %74 {strides = array<i32>} : memref<1x1x32xf32, #tpu.memory_space<vmem>>, vector<1x1x32xf32>,
    } else {
    }
    return
  }
  func.func @transform_0(%arg0: i32, %arg1: i32) -> (i32, i32, i32) {
    %c0_i32 = arith.constant 0 : i32
    %c0_i32_0 = arith.constant 0 : i32
    return %arg0, %c0_i32, %arg1 : i32, i32, i32
  }
  func.func @transform_1(%arg0: i32, %arg1: i32) -> (i32, i32) {
    %c0_i32 = arith.constant 0 : i32
    %c0_i32_0 = arith.constant 0 : i32
    %c0_i32_1 = arith.constant 0 : i32
    return %c0_i32, %c0_i32_0 : i32, i32
  }
  func.func @transform_2(%arg0: i32, %arg1: i32) -> (i32, i32) {
    %c0_i32 = arith.constant 0 : i32
    %c0_i32_0 = arith.constant 0 : i32
    %c0_i32_1 = arith.constant 0 : i32
    return %c0_i32, %c0_i32_0 : i32, i32
  }
  func.func @transform_3(%arg0: i32, %arg1: i32) -> (i32, i32) {
    %c0_i32 = arith.constant 0 : i32
    %c0_i32_0 = arith.constant 0 : i32
    %c0_i32_1 = arith.constant 0 : i32
    return %c0_i32, %c0_i32_0 : i32, i32
  }
  func.func @transform_4(%arg0: i32, %arg1: i32) -> (i32, i32) {
    %c0_i32 = arith.constant 0 : i32
    %c0_i32_0 = arith.constant 0 : i32
    %c0_i32_1 = arith.constant 0 : i32
    return %c0_i32, %c0_i32_0 : i32, i32
  }
  func.func @transform_5(%arg0: i32, %arg1: i32) -> (i32, i32) {
    %c0_i32 = arith.constant 0 : i32
    %c0_i32_0 = arith.constant 0 : i32
    %c0_i32_1 = arith.constant 0 : i32
    return %c0_i32, %c0_i32_0 : i32, i32
  }
  func.func @transform_6(%arg0: i32, %arg1: i32) -> (i32, i32) {
    %c0_i32 = arith.constant 0 : i32
    %c0_i32_0 = arith.constant 0 : i32
    %c0_i32_1 = arith.constant 0 : i32
    return %c0_i32, %c0_i32_0 : i32, i32
  }
  func.func @transform_7(%arg0: i32, %arg1: i32) -> (i32, i32) {
    %c0_i32 = arith.constant 0 : i32
    %c0_i32_0 = arith.constant 0 : i32
    %c0_i32_1 = arith.constant 0 : i32
    return %c0_i32, %c0_i32_0 : i32, i32
  }
  func.func @transform_8(%arg0: i32, %arg1: i32) -> (i32, i32, i32) {
    %c0_i32 = arith.constant 0 : i32
    %c0_i32_0 = arith.constant 0 : i32
    %c0_i32_1 = arith.constant 0 : i32
    return %arg0, %c0_i32, %c0_i32_0 : i32, i32, i32
  }
}

</mosaic_0001>

<llo_original>
// kernel: tpu_custom_call.1
$region0: #{tpu_custom_call.1}
  #allocation0 [shape = 'u32[]', space=smem, size = 0x4, offset = 0x4, fixed_abs, tag = 'smem constant byte address 0x4 - core index']
  #allocation1 [shape = 'u32[144,128]{1,0:T(1,128)}', space=vmem, size = 0x12000, scoped, tag = 'internal scratch']
  #allocation2 [shape = 'f32[1,1,1]{2,1,0:T(1,128)}', space=vmem, size = 0x200, scoped, tag = 'scratch operand']
  #allocation3 [shape = 'f32[1,1,1]{2,1,0:T(1,128)}', space=vmem, size = 0x200, scoped, tag = 'scratch operand']
  #allocation4 [shape = 'f32[1,32,1]{2,1,0:T(8,128)}', space=vmem, size = 0x4000, scoped, tag = 'scratch operand']
  %s0 = inlined_call_operand.hbm [shape: f32[2,32,256], index: 0, kind: input, shape index: {}]
  %s1 = inlined_call_operand.vmem [shape: f32[32,1], index: 1, kind: input, shape index: {}]
  %s2 = inlined_call_operand.vmem [shape: f32[32,4], index: 2, kind: input, shape index: {}]
  %s3 = inlined_call_operand.vmem [shape: f32[1,4], index: 3, kind: input, shape index: {}]
  %s4 = inlined_call_operand.vmem [shape: f32[1,4], index: 4, kind: input, shape index: {}]
  %s5 = inlined_call_operand.vmem [shape: f32[1,4], index: 5, kind: input, shape index: {}]
  %s6 = inlined_call_operand.vmem [shape: f32[4,32], index: 6, kind: input, shape index: {}]
  %s7 = inlined_call_operand.vmem [shape: f32[1,32], index: 7, kind: input, shape index: {}]
  %s8 = inlined_call_operand.hbm [shape: f32[2,1,32], index: 8, kind: output, shape index: {}]
  %s9 = sld [smem:[#allocation0]]
  $region77: #{tpu_custom_call.1} parent=0
    _
  %s11 = ssub.s32 1, %s9
  %s12 = scalar_select 0, %s11, %s9
  $region1: #{tpu_custom_call.1} parent=0
    #allocation5 [shape = 'u8[65536]{0}', space=vmem, size = 0x10000, scoped, tag = 'input window, operand 0']
    #allocation6 [shape = 's32[2]{0}', space=sflag, size = 0x8, scoped, tag = 'scoped memory for tpu_custom_call.1']
    #allocation7 [shape = 's32[2]{0}', space=sflag, size = 0x8, scoped, tag = 'scoped memory for tpu_custom_call.1']
    #allocation8 [shape = 'u8[1024]{0}', space=vmem, size = 0x400, scoped, tag = 'output window, operand 0']
    %13 = vsyncpa [#allocation6], 0
    %s14 = scalar_lea.sflag [#allocation6], 1
    %15 = vsyncpa %s14, 0
    %16 = vsyncpa [#allocation7], 0
    %s17 = scalar_lea.sflag [#allocation7], 1
    %18 = vsyncpa %s17, 0
    loop: start=0, step=1, limit=4
    $region2: #{tpu_custom_call.1} parent=1 // loop_pre_header
      _
    $region3: #{tpu_custom_call.1} parent=1 // loop_header
      %s20 = sphi 0, %s24
      %p21 = scmp.ge.s32.totalorder %s20, 4
      %s27 = sphi 0, %s39
      %s28 = sphi 0, %s35
      %s29 = sphi 0, %s27
      %s30 = sphi 0, %s28
      %s31 = sphi 0, %s29
      %s32 = sphi 0, %s30
      %s44 = sphi 0, %s46
      %s47 = sphi 0, %s44
      %s48 = sphi 0, %s47
      %s64 = sphi 0, %s48
      %s68 = sphi 0, %s68
      %s70 = sphi 0, %s68
      %s71 = sphi 0, %s70
      %s85 = sphi 0, %s71
      %s89 = sphi 0, %s89
      %s91 = sphi 0, %s89
      %s92 = sphi 0, %s91
      %s106 = sphi 0, %s92
      %s110 = sphi 0, %s110
      %s112 = sphi 0, %s110
      %s113 = sphi 0, %s112
      %s127 = sphi 0, %s113
      %s131 = sphi 0, %s131
      %s133 = sphi 0, %s131
      %s134 = sphi 0, %s133
      %s148 = sphi 0, %s134
      %s152 = sphi 0, %s152
      %s154 = sphi 0, %s152
      %s155 = sphi 0, %s154
      %s169 = sphi 0, %s155
      %s173 = sphi 0, %s173
      %s175 = sphi 0, %s173
      %s176 = sphi 0, %s175
      %s190 = sphi 0, %s176
      %s194 = sphi 0, %s194
      %s196 = sphi 0, %s194
      %s197 = sphi 0, %s196
      %s211 = sphi 0, %s197
      %s217 = sphi 0, %s219
      %s220 = sphi 0, %s217
      %s221 = sphi 0, %s220
      %s237 = sphi 0, %s221
    $region4: #{tpu_custom_call.1} parent=1 // loop_header_branch
      %23 = sbr.rel (%p21) target = $region8
    $region5: #{tpu_custom_call.1} parent=1 // loop_body
      %s25 = ssub.s32 %s20, 1
      %s26 = ssub.s32 %s20, 2
      %s33 = sadd.s32 1, %s28
      %p34 = scmp.ge.s32.totalorder %s33, 1
      %s35 = scalar_select %p34, 0, %s33
      %s36 = sadd.s32 1, %s27
      %s37 = scalar_select %p34, %s36, %s27
      %p38 = scmp.ge.s32.totalorder %s37, 2
      %s39 = scalar_select %p38, 0, %s37
      %s40 = ssub.s32 %s27, %s39
      %s41 = ssub.s32 %s28, %s35
      %s42 = sor.u32 %s40, %s41
      %p43 = scmp.eq.s32.totalorder %s42, 0
      %s45 = sadd.s32 %s44, 1
      %s46 = scalar_select %p43, %s44, %s45
      %p49 = pneg %p43
      %p50 = scmp.eq.s32.totalorder %s20, 1
      %p51 = por %p49, %p50
      %p52 = scmp.ne.s32.totalorder %s44, %s47
      %p53 = scmp.eq.s32.totalorder %s20, 0
      %p54 = por %p52, %p53
      %p55 = scmp.ne.s32.totalorder %s44, %s47
      %p56 = scmp.eq.s32.totalorder %s25, 1
      %p57 = por %p55, %p56
      %p58 = scmp.ne.s32.totalorder %s47, %s48
      %p59 = scmp.eq.s32.totalorder %s25, 0
      %p60 = por %p58, %p59
      %p61 = scmp.ne.s32.totalorder %s47, %s48
      %p62 = scmp.eq.s32.totalorder %s26, 1
      %p63 = por %p61, %p62
      %p65 = scmp.ne.s32.totalorder %s48, %s64
      %p66 = scmp.eq.s32.totalorder %s26, 0
      %p67 = por %p65, %p66
      %s69 = sadd.s32 %s68, 1
      %p72 = scmp.eq.s32.totalorder %s20, 1
      %p73 = scmp.ne.s32.totalorder %s68, %s70
      %p74 = scmp.eq.s32.totalorder %s20, 0
      %p75 = por %p73, %p74
      %p76 = scmp.ne.s32.totalorder %s68, %s70
      %p77 = scmp.eq.s32.totalorder %s25, 1
      %p78 = por %p76, %p77
      %p79 = scmp.ne.s32.totalorder %s70, %s71
      %p80 = scmp.eq.s32.totalorder %s25, 0
      %p81 = por %p79, %p80
      %p82 = scmp.ne.s32.totalorder %s70, %s71
      %p83 = scmp.eq.s32.totalorder %s26, 1
      %p84 = por %p82, %p83
      %p86 = scmp.ne.s32.totalorder %s71, %s85
      %p87 = scmp.eq.s32.totalorder %s26, 0
      %p88 = por %p86, %p87
      %s90 = sadd.s32 %s89, 1
      %p93 = scmp.eq.s32.totalorder %s20, 1
      %p94 = scmp.ne.s32.totalorder %s89, %s91
      %p95 = scmp.eq.s32.totalorder %s20, 0
      %p96 = por %p94, %p95
      %p97 = scmp.ne.s32.totalorder %s89, %s91
      %p98 = scmp.eq.s32.totalorder %s25, 1
      %p99 = por %p97, %p98
      %p100 = scmp.ne.s32.totalorder %s91, %s92
      %p101 = scmp.eq.s32.totalorder %s25, 0
      %p102 = por %p100, %p101
      %p103 = scmp.ne.s32.totalorder %s91, %s92
      %p104 = scmp.eq.s32.totalorder %s26, 1
      %p105 = por %p103, %p104
      %p107 = scmp.ne.s32.totalorder %s92, %s106
      %p108 = scmp.eq.s32.totalorder %s26, 0
      %p109 = por %p107, %p108
      %s111 = sadd.s32 %s110, 1
      %p114 = scmp.eq.s32.totalorder %s20, 1
      %p115 = scmp.ne.s32.totalorder %s110, %s112
      %p116 = scmp.eq.s32.totalorder %s20, 0
      %p117 = por %p115, %p116
      %p118 = scmp.ne.s32.totalorder %s110, %s112
      %p119 = scmp.eq.s32.totalorder %s25, 1
      %p120 = por %p118, %p119
      %p121 = scmp.ne.s32.totalorder %s112, %s113
      %p122 = scmp.eq.s32.totalorder %s25, 0
      %p123 = por %p121, %p122
      %p124 = scmp.ne.s32.totalorder %s112, %s113
      %p125 = scmp.eq.s32.totalorder %s26, 1
      %p126 = por %p124, %p125
      %p128 = scmp.ne.s32.totalorder %s113, %s127
      %p129 = scmp.eq.s32.totalorder %s26, 0
      %p130 = por %p128, %p129
      %s132 = sadd.s32 %s131, 1
      %p135 = scmp.eq.s32.totalorder %s20, 1
      %p136 = scmp.ne.s32.totalorder %s131, %s133
      %p137 = scmp.eq.s32.totalorder %s20, 0
      %p138 = por %p136, %p137
      %p139 = scmp.ne.s32.totalorder %s131, %s133
      %p140 = scmp.eq.s32.totalorder %s25, 1
      %p141 = por %p139, %p140
      %p142 = scmp.ne.s32.totalorder %s133, %s134
      %p143 = scmp.eq.s32.totalorder %s25, 0
      %p144 = por %p142, %p143
      %p145 = scmp.ne.s32.totalorder %s133, %s134
      %p146 = scmp.eq.s32.totalorder %s26, 1
      %p147 = por %p145, %p146
      %p149 = scmp.ne.s32.totalorder %s134, %s148
      %p150 = scmp.eq.s32.totalorder %s26, 0
      %p151 = por %p149, %p150
      %s153 = sadd.s32 %s152, 1
      %p156 = scmp.eq.s32.totalorder %s20, 1
      %p157 = scmp.ne.s32.totalorder %s152, %s154
      %p158 = scmp.eq.s32.totalorder %s20, 0
      %p159 = por %p157, %p158
      %p160 = scmp.ne.s32.totalorder %s152, %s154
      %p161 = scmp.eq.s32.totalorder %s25, 1
      %p162 = por %p160, %p161
      %p163 = scmp.ne.s32.totalorder %s154, %s155
      %p164 = scmp.eq.s32.totalorder %s25, 0
      %p165 = por %p163, %p164
      %p166 = scmp.ne.s32.totalorder %s154, %s155
      %p167 = scmp.eq.s32.totalorder %s26, 1
      %p168 = por %p166, %p167
      %p170 = scmp.ne.s32.totalorder %s155, %s169
      %p171 = scmp.eq.s32.totalorder %s26, 0
      %p172 = por %p170, %p171
      %s174 = sadd.s32 %s173, 1
      %p177 = scmp.eq.s32.totalorder %s20, 1
      %p178 = scmp.ne.s32.totalorder %s173, %s175
      %p179 = scmp.eq.s32.totalorder %s20, 0
      %p180 = por %p178, %p179
      %p181 = scmp.ne.s32.totalorder %s173, %s175
      %p182 = scmp.eq.s32.totalorder %s25, 1
      %p183 = por %p181, %p182
      %p184 = scmp.ne.s32.totalorder %s175, %s176
      %p185 = scmp.eq.s32.totalorder %s25, 0
      %p186 = por %p184, %p185
      %p187 = scmp.ne.s32.totalorder %s175, %s176
      %p188 = scmp.eq.s32.totalorder %s26, 1
      %p189 = por %p187, %p188
      %p191 = scmp.ne.s32.totalorder %s176, %s190
      %p192 = scmp.eq.s32.totalorder %s26, 0
      %p193 = por %p191, %p192
      %s195 = sadd.s32 %s194, 1
      %p198 = scmp.eq.s32.totalorder %s20, 1
      %p199 = scmp.ne.s32.totalorder %s194, %s196
      %p200 = scmp.eq.s32.totalorder %s20, 0
      %p201 = por %p199, %p200
      %p202 = scmp.ne.s32.totalorder %s194, %s196
      %p203 = scmp.eq.s32.totalorder %s25, 1
      %p204 = por %p202, %p203
      %p205 = scmp.ne.s32.totalorder %s196, %s197
      %p206 = scmp.eq.s32.totalorder %s25, 0
      %p207 = por %p205, %p206
      %p208 = scmp.ne.s32.totalorder %s196, %s197
      %p209 = scmp.eq.s32.totalorder %s26, 1
      %p210 = por %p208, %p209
      %p212 = scmp.ne.s32.totalorder %s197, %s211
      %p213 = scmp.eq.s32.totalorder %s26, 0
      %p214 = por %p212, %p213
      %s215 = ssub.s32 %s27, %s39
      %p216 = scmp.eq.s32.totalorder %s215, 0
      %s218 = sadd.s32 %s217, 1
      %s219 = scalar_select %p216, %s217, %s218
      %p222 = pneg %p216
      %p223 = scmp.eq.s32.totalorder %s20, 1
      %p224 = por %p222, %p223
      %p225 = scmp.ne.s32.totalorder %s217, %s220
      %p226 = scmp.eq.s32.totalorder %s20, 0
      %p227 = por %p225, %p226
      %p228 = scmp.ne.s32.totalorder %s217, %s220
      %p229 = scmp.eq.s32.totalorder %s25, 1
      %p230 = por %p228, %p229
      %p231 = scmp.ne.s32.totalorder %s220, %s221
      %p232 = scmp.eq.s32.totalorder %s25, 0
      %p233 = por %p231, %p232
      %p234 = scmp.ne.s32.totalorder %s220, %s221
      %p235 = scmp.eq.s32.totalorder %s26, 1
      %p236 = por %p234, %p235
      %p238 = scmp.ne.s32.totalorder %s221, %s237
      %p239 = scmp.eq.s32.totalorder %s26, 0
      %p240 = por %p238, %p239
      %p241 = scmp.le.s32.totalorder 1, %s20
      %p242 = scmp.lt.s32.totalorder %s20, 3
      %p243 = pnand %p241, %p242
      %p244 = pneg %p243
      // Predicated region
      $region9: #{tpu_custom_call.1} parent=5 // pred_check
        _
      $region10: #{tpu_custom_call.1} parent=5 // pred_check_branch
        %246 = sbr.rel (%p243) target = $region12
      $region11: #{tpu_custom_call.1} parent=5 // pred_region
        %s247 = ssub.s32 %s20, 1
        // Predicated region
        $region13: #{tpu_custom_call.1} parent=11 // pred_check
          %p248 = pneg %p81
        $region14: #{tpu_custom_call.1} parent=11 // pred_check_branch
          %250 = sbr.rel (%p248) target = $region16
        $region15: #{tpu_custom_call.1} parent=11 // pred_region
          _
        $region16: #{tpu_custom_call.1} parent=11 // pred_fallthru
          _
        // Predicated region
        $region17: #{tpu_custom_call.1} parent=11 // pred_check
          %p251 = pneg %p102
        $region18: #{tpu_custom_call.1} parent=11 // pred_check_branch
          %253 = sbr.rel (%p251) target = $region20
        $region19: #{tpu_custom_call.1} parent=11 // pred_region
          _
        $region20: #{tpu_custom_call.1} parent=11 // pred_fallthru
          _
        // Predicated region
        $region21: #{tpu_custom_call.1} parent=11 // pred_check
          %p254 = pneg %p123
        $region22: #{tpu_custom_call.1} parent=11 // pred_check_branch
          %256 = sbr.rel (%p254) target = $region24
        $region23: #{tpu_custom_call.1} parent=11 // pred_region
          _
        $region24: #{tpu_custom_call.1} parent=11 // pred_fallthru
          _
        // Predicated region
        $region25: #{tpu_custom_call.1} parent=11 // pred_check
          %p257 = pneg %p144
        $region26: #{tpu_custom_call.1} parent=11 // pred_check_branch
          %259 = sbr.rel (%p257) target = $region28
        $region27: #{tpu_custom_call.1} parent=11 // pred_region
          _
        $region28: #{tpu_custom_call.1} parent=11 // pred_fallthru
          _
        // Predicated region
        $region29: #{tpu_custom_call.1} parent=11 // pred_check
          %p260 = pneg %p165
        $region30: #{tpu_custom_call.1} parent=11 // pred_check_branch
          %262 = sbr.rel (%p260) target = $region32
        $region31: #{tpu_custom_call.1} parent=11 // pred_region
          _
        $region32: #{tpu_custom_call.1} parent=11 // pred_fallthru
          _
        // Predicated region
        $region33: #{tpu_custom_call.1} parent=11 // pred_check
          %p263 = pneg %p186
        $region34: #{tpu_custom_call.1} parent=11 // pred_check_branch
          %265 = sbr.rel (%p263) target = $region36
        $region35: #{tpu_custom_call.1} parent=11 // pred_region
          _
        $region36: #{tpu_custom_call.1} parent=11 // pred_fallthru
          _
        // Predicated region
        $region37: #{tpu_custom_call.1} parent=11 // pred_check
          %p266 = pneg %p207
        $region38: #{tpu_custom_call.1} parent=11 // pred_check_branch
          %268 = sbr.rel (%p266) target = $region40
        $region39: #{tpu_custom_call.1} parent=11 // pred_region
          _
        $region40: #{tpu_custom_call.1} parent=11 // pred_fallthru
          _
      $region12: #{tpu_custom_call.1} parent=5 // pred_fallthru
        _
      %p269 = scmp.lt.s32.totalorder %s20, 2
      // Predicated region
      $region41: #{tpu_custom_call.1} parent=5 // pred_check
        %p270 = pneg %p269
      $region42: #{tpu_custom_call.1} parent=5 // pred_check_branch
        %272 = sbr.rel (%p270) target = $region44
      $region43: #{tpu_custom_call.1} parent=5 // pred_region
        // Predicated region
        $region45: #{tpu_custom_call.1} parent=43 // pred_check
          %p273 = pneg %p54
        $region46: #{tpu_custom_call.1} parent=43 // pred_check_branch
          %275 = sbr.rel (%p273) target = $region48
        $region47: #{tpu_custom_call.1} parent=43 // pred_region
          %s276 = sand.u32 %s44, 1
          %s277 = scalar_lea.sflag [#allocation6], %s276
          %s278 = sand.u32 %s44, 1
          %s279 = smul.addr %s278, 64
          %s280 = scalar_lea.vmem [#allocation5], %s279
          %s281 = smul.u32 2, %s28
          %s283 = ssub.s32 1024, 1024
          %284 = vsyncadd %s277, %s283
          %s285 = smul.addr %s27, 8
          %s286 = sadd.s32 %s281, %s285
          %s287 = smul.addr %s286, 128
          %s288 = scalar_lea.hbm %s0, %s287
          %s289 = sshll.u32 %s280, 4
          %s290 = int_to_ptr.vmem [resolvable:$true] %s289
          %295 = dma.hbm_to_vmem [thread:$0]  %s288, 1024, %s290, %s277, 256, 256, 16
        $region48: #{tpu_custom_call.1} parent=43 // pred_fallthru
          _
      $region44: #{tpu_custom_call.1} parent=5 // pred_fallthru
        _
      %p296 = scmp.le.s32.totalorder 1, %s20
      %p297 = scmp.lt.s32.totalorder %s20, 3
      %p298 = pnand %p296, %p297
      %p299 = pneg %p298
      // Predicated region
      $region49: #{tpu_custom_call.1} parent=5 // pred_check
        _
      $region50: #{tpu_custom_call.1} parent=5 // pred_check_branch
        %301 = sbr.rel (%p298) target = $region52
      $region51: #{tpu_custom_call.1} parent=5 // pred_region
        %s302 = ssub.s32 %s20, 1
        %s303 = sand.u32 %s47, 1
        %s304 = scalar_lea.sflag [#allocation6], %s303
        %s305 = sand.u32 %s47, 1
        %s306 = smul.addr %s305, 64
        %s307 = scalar_lea.vmem [#allocation5], %s306
        // Predicated region
        $region53: #{tpu_custom_call.1} parent=51 // pred_check
          %p308 = pneg %p60
        $region54: #{tpu_custom_call.1} parent=51 // pred_check_branch
          %310 = sbr.rel (%p308) target = $region56
        $region55: #{tpu_custom_call.1} parent=51 // pred_region
          %311 = dma.done %s304, 1024
        $region56: #{tpu_custom_call.1} parent=51 // pred_fallthru
          _
        %s312 = sand.u32 %s47, 1
        %s313 = scalar_lea.sflag [#allocation6], %s312
        %s314 = sand.u32 %s47, 1
        %s315 = smul.addr %s314, 64
        %s316 = scalar_lea.vmem [#allocation5], %s315
        %p317 = pneg %p60
        %p318 = pneg %p57
        %p319 = pneg %p81
        %p320 = pneg %p78
        %p321 = pneg %p102
        %p322 = pneg %p99
        %p323 = pneg %p123
        %p324 = pneg %p120
        %p325 = pneg %p144
        %p326 = pneg %p141
        %p327 = pneg %p165
        %p328 = pneg %p162
        %p329 = pneg %p186
        %p330 = pneg %p183
        %p331 = pneg %p207
        %p332 = pneg %p204
        %p333 = pneg %p233
        %p334 = pneg %p230
        %s335 = sand.u32 %s220, 1
        %s336 = scalar_lea.sflag [#allocation7], %s335
        %s337 = sand.u32 %s220, 1
        %s338 = scalar_lea.vmem [#allocation8], %s337
        %s339 = smul.u32 2, %s30
        %p340 = scmp.eq.s32.totalorder %s30, 0
        // Predicated region
        $region57: #{tpu_custom_call.1} parent=51 // pred_check
          %p341 = pneg %p340
        $region58: #{tpu_custom_call.1} parent=51 // pred_check_branch
          %343 = sbr.rel (%p341) target = $region60
        $region59: #{tpu_custom_call.1} parent=51 // pred_region
          %vm344 = vcmask 0
          %345 = vst.msk [vmem:[#allocation2] sm:$0x1] %vm344, -inf
          %346 = vst.msk [vmem:[#allocation3] sm:$0x1] %vm344, 0.0
          %vm347 = vcmask 7168
          %348 = vst.msk [vmem:[#allocation4] sm:$0xff] %vm347, 0.0
          %349 = vst.msk [vmem:[#allocation4 + $0x8] sm:$0xff] %vm347, 0.0
          %350 = vst.msk [vmem:[#allocation4 + $0x10] sm:$0xff] %vm347, 0.0
          %351 = vst.msk [vmem:[#allocation4 + $0x18] sm:$0xff] %vm347, 0.0
        $region60: #{tpu_custom_call.1} parent=51 // pred_fallthru
          _
        %v352 = vld [vmem:[%s307] sm:$0xff]
        %v353 = vld [vmem:[%s307 + $0x8] sm:$0xff]
        %v354 = vld [vmem:[%s307 + $0x10] sm:$0xff]
        %v355 = vld [vmem:[%s307 + $0x18] sm:$0xff]
        %v356 = vld [vmem:[%s307 + $0x20] sm:$0xff]
        %v357 = vld [vmem:[%s307 + $0x28] sm:$0xff]
        %v358 = vld [vmem:[%s307 + $0x30] sm:$0xff]
        %v359 = vld [vmem:[%s307 + $0x38] sm:$0xff]
        %v360 = vld [vmem:[%s1] sm:$0xff]
        %v361 = vld [vmem:[%s1 + $0x8] sm:$0xff]
        %v362 = vld [vmem:[%s1 + $0x10] sm:$0xff]
        %v363 = vld [vmem:[%s1 + $0x18] sm:$0xff]
        %365 = vset.pattern.permute.xlu0 0
        %366 = vperm.xlu0 %365, %v360
        %v367 = vpop.permute.xlu0 %366
        %370 = vset.pattern.permute.xlu0 0
        %371 = vperm.xlu0 %370, %v361
        %v372 = vpop.permute.xlu0 %371
        %375 = vset.pattern.permute.xlu0 0
        %376 = vperm.xlu0 %375, %v362
        %v377 = vpop.permute.xlu0 %376
        %380 = vset.pattern.permute.xlu0 0
        %381 = vperm.xlu0 %380, %v363
        %v382 = vpop.permute.xlu0 %381
        %v384 = vmul.f32 %v352, %v367
        %v385 = vmul.f32 %v353, %v367
        %v386 = vmul.f32 %v354, %v372
        %v387 = vmul.f32 %v355, %v372
        %v388 = vmul.f32 %v356, %v377
        %v389 = vmul.f32 %v357, %v377
        %v390 = vmul.f32 %v358, %v382
        %v391 = vmul.f32 %v359, %v382
        %v392 = vadd.f32 %v384, %v386
        %v393 = vadd.f32 %v392, %v388
        %v394 = vadd.f32 %v393, %v390
        %v395 = vrot.slane %v394, 4
        %v396 = vadd.f32 %v394, %v395
        %v397 = vrot.slane %v396, 2
        %v398 = vadd.f32 %v396, %v397
        %v399 = vrot.slane %v398, 1
        %v400 = vadd.f32 %v398, %v399
        %v401 = vadd.f32 %v385, %v387
        %v402 = vadd.f32 %v401, %v389
        %v403 = vadd.f32 %v402, %v391
        %v404 = vrot.slane %v403, 4
        %v405 = vadd.f32 %v403, %v404
        %v406 = vrot.slane %v405, 2
        %v407 = vadd.f32 %v405, %v406
        %v408 = vrot.slane %v407, 1
        %v409 = vadd.f32 %v407, %v408
        %v410 = vld [vmem:[#allocation2] sm:$0x1]
        %v411 = vmax.f32 %v400, %v409
        %412 = vmax.xlane.f32.xlu0 %v411
        %v413 = vpop.xlane.xlu0 %412
        %v414 = vmax.f32 %v410, %v413
        %v415 = vsub.f32 %v410, %v414
        %v416 = vmul.f32 %v415, 1.442695
        %v417 = vpow.pop %v416
        %419 = vset.pattern.permute.xlu0 0
        %420 = vperm.xlu0 %419, %v414
        %v421 = vpop.permute.xlu0 %420
        %v423 = vlaneseq
        %v424 = vshrl.u32 %v423, 7
        %v425 = vsub.s32 0, %v424
        %v426 = vrot.slane %v421, %v425
        %v427 = vsub.f32 %v400, %v426
        %v428 = vsub.f32 %v409, %v426
        %v429 = vmul.f32 %v427, 1.442695
        %v430 = vpow.pop %v429
        %v431 = vmul.f32 %v428, 1.442695
        %v432 = vpow.pop %v431
        %v433 = vld [vmem:[#allocation3] sm:$0x1]
        %v434 = vmul.f32 %v417, %v433
        %v435 = vadd.f32 %v430, %v432
        %436 = vadd.xlane.f32.xlu0 %v435
        %v437 = vpop.xlane.xlu0 %436
        %v438 = vadd.f32 %v434, %v437
        %vm439 = vcmask 0
        %440 = vst.msk [vmem:[#allocation3] sm:$0x1] %vm439, %v438
        %v441 = vmul.f32 %v352, %v430
        %v442 = vmul.f32 %v353, %v432
        %v443 = vmul.f32 %v354, %v430
        %v444 = vmul.f32 %v355, %v432
        %v445 = vmul.f32 %v356, %v430
        %v446 = vmul.f32 %v357, %v432
        %v447 = vmul.f32 %v358, %v430
        %v448 = vmul.f32 %v359, %v432
        %v449 = vadd.f32 %v441, %v442
        %450 = vadd.xlane.f32.xlu0 %v449
        %v451 = vpop.xlane.xlu0 %450
        %v452 = vadd.f32 %v443, %v444
        %453 = vadd.xlane.f32.xlu0 %v452
        %v454 = vpop.xlane.xlu0 %453
        %v455 = vadd.f32 %v445, %v446
        %456 = vadd.xlane.f32.xlu0 %v455
        %v457 = vpop.xlane.xlu0 %456
        %v458 = vadd.f32 %v447, %v448
        %459 = vadd.xlane.f32.xlu0 %v458
        %v460 = vpop.xlane.xlu0 %459
        %v461 = vld [vmem:[#allocation4] sm:$0xff]
        %v462 = vld [vmem:[#allocation4 + $0x8] sm:$0xff]
        %v463 = vld [vmem:[#allocation4 + $0x10] sm:$0xff]
        %v464 = vld [vmem:[#allocation4 + $0x18] sm:$0xff]
        %v466 = vlaneseq
        %v467 = vshrl.u32 %v466, 7
        %v468 = vsub.s32 0, %v467
        %v469 = vrot.slane %v417, %v468
        %v471 = vmul.f32 %v469, %v461
        %v472 = vmul.f32 %v469, %v462
        %v473 = vmul.f32 %v469, %v463
        %v474 = vmul.f32 %v469, %v464
        %v475 = vadd.f32 %v471, %v451
        %v476 = vadd.f32 %v472, %v454
        %v477 = vadd.f32 %v473, %v457
        %v478 = vadd.f32 %v474, %v460
        %vm479 = vcmask 7168
        %480 = vst.msk [vmem:[#allocation4] sm:$0xff] %vm479, %v475
        %481 = vst.msk [vmem:[#allocation4 + $0x8] sm:$0xff] %vm479, %v476
        %482 = vst.msk [vmem:[#allocation4 + $0x10] sm:$0xff] %vm479, %v477
        %483 = vst.msk [vmem:[#allocation4 + $0x18] sm:$0xff] %vm479, %v478
        %484 = vst.msk [vmem:[#allocation2] sm:$0x1] %vm439, %v414
        // Predicated region
        $region61: #{tpu_custom_call.1} parent=51 // pred_check
          %p485 = pneg %p340
        $region62: #{tpu_custom_call.1} parent=51 // pred_check_branch
          %487 = sbr.rel (%p485) target = $region64
        $region63: #{tpu_custom_call.1} parent=51 // pred_region
          %v488 = vld [vmem:[#allocation3] sm:$0x1]
          %v489 = vrcp.pop %v488
          %v490 = vld [vmem:[#allocation4] sm:$0xff]
          %v491 = vld [vmem:[#allocation4 + $0x8] sm:$0xff]
          %v492 = vld [vmem:[#allocation4 + $0x10] sm:$0xff]
          %v493 = vld [vmem:[#allocation4 + $0x18] sm:$0xff]
          %495 = vset.pattern.permute.xlu0 0
          %496 = vperm.xlu0 %495, %v489
          %v497 = vpop.permute.xlu0 %496
          %v499 = vlaneseq
          %v500 = vshrl.u32 %v499, 7
          %v501 = vsub.s32 0, %v500
          %v502 = vrot.slane %v497, %v501
          %v503 = vmul.f32 %v490, %v502
          %v504 = vmul.f32 %v491, %v502
          %v505 = vmul.f32 %v492, %v502
          %v506 = vmul.f32 %v493, %v502
          %v507 = vld [vmem:[%s2] sm:$0xff]
          %v508 = vld [vmem:[%s2 + $0x8] sm:$0xff]
          %v509 = vld [vmem:[%s2 + $0x10] sm:$0xff]
          %v510 = vld [vmem:[%s2 + $0x18] sm:$0xff]
          %v511 = vld [vmem:[%s3] sm:$0x1]
          %516 = vset.pattern.permute.xlu0 0
          %517 = vperm.xlu0 %516, %v503
          %v518 = vpop.permute.xlu0 %517
          %519 = vset.pattern.permute.xlu0 0
          %520 = vperm.xlu0 %519, %v504
          %v521 = vpop.permute.xlu0 %520
          %522 = vset.pattern.permute.xlu0 0
          %523 = vperm.xlu0 %522, %v505
          %v524 = vpop.permute.xlu0 %523
          %525 = vset.pattern.permute.xlu0 0
          %526 = vperm.xlu0 %525, %v506
          %v527 = vpop.permute.xlu0 %526
          %v528 = vlaneseq
          %v529 = vand.u32 %v528, 127
          %v530 = vlaneseq
          %v531 = vshrl.u32 %v530, 7
          %v532 = vsub.s32 %v529, %v531
          %v533 = vrot.slane %v518, %v532
          %v534 = vadd.s32 %v529, 4294967288
          %v535 = vlaneseq
          %v536 = vshrl.u32 %v535, 7
          %v537 = vsub.s32 %v534, %v536
          %v538 = vrot.slane %v521, %v537
          %vm539 = vcmask 130112
          %v540 = vsel %vm539, %v538, %v533
          %v541 = vadd.s32 %v529, 4294967280
          %v542 = vlaneseq
          %v543 = vshrl.u32 %v542, 7
          %v544 = vsub.s32 %v541, %v543
          %v545 = vrot.slane %v524, %v544
          %vm546 = vcmask 195712
          %v547 = vsel %vm546, %v545, %v540
          %v548 = vadd.s32 %v529, 4294967272
          %v549 = vlaneseq
          %v550 = vshrl.u32 %v549, 7
          %v551 = vsub.s32 %v548, %v550
          %v552 = vrot.slane %v527, %v551
          %vm553 = vcmask 261312
          %v554 = vsel %vm553, %v552, %v547
          %vm555 = vcmask 261120
          %v556 = vsel %vm555, %v554, 0
          %558 = vmatprep.subr.mxu0 0.0
          %559 = vmatpush1.msra.mxu0 %v507
          %560 = vmatprep.subr.mxu0 0.0
          %561 = vmatpush1.msra.mxu0 %v508
          %562 = vmatprep.subr.mxu0 0.0
          %563 = vmatpush1.msra.mxu0 %v509
          %564 = vmatprep.subr.mxu0 0.0
          %565 = vmatpush1.msra.mxu0 %v510
          %566 = vmatprep.subr.mxu0 0.0
          %567 = vmatpush1.msra.mxu0 0.0
          %568 = vmatprep.subr.mxu0 0.0
          %569 = vmatpush1.msra.mxu0 0.0
          %570 = vmatprep.subr.mxu0 0.0
          %571 = vmatpush1.msra.mxu0 0.0
          %572 = vmatprep.subr.mxu0 0.0
          %573 = vmatpush1.msra.mxu0 0.0
          %574 = vmatprep.subr.mxu0 0.0
          %575 = vmatpush1.msra.mxu0 0.0
          %576 = vmatprep.subr.mxu0 0.0
          %577 = vmatpush1.msra.mxu0 0.0
          %578 = vmatprep.subr.mxu0 0.0
          %579 = vmatpush1.msra.mxu0 0.0
          %580 = vmatprep.subr.mxu0 0.0
          %581 = vmatpush1.msra.mxu0 0.0
          %582 = vmatprep.subr.mxu0 0.0
          %583 = vmatpush1.msra.mxu0 0.0
          %584 = vmatprep.subr.mxu0 0.0
          %585 = vmatpush1.msra.mxu0 0.0
          %586 = vmatprep.subr.mxu0 0.0
          %587 = vmatpush1.msra.mxu0 0.0
          %588 = vmatprep.subr.mxu0 0.0
          %589 = vmatpush1.msra.mxu0 0.0
          %590 = vmatprep.subr.mxu0 0.0
          %591 = vmatpush1.msra.mxu0 0.0
          %592 = vmatprep.subr.mxu0 0.0
          %593 = vmatpush1.msra.mxu0 0.0
          %594 = vmatprep.subr.mxu0 0.0
          %595 = vmatpush1.msra.mxu0 0.0
          %596 = vmatprep.subr.mxu0 0.0
          %597 = vmatpush1.msra.mxu0 0.0
          %598 = vmatprep.subr.mxu0 0.0
          %599 = vmatpush1.msra.mxu0 0.0
          %600 = vmatprep.subr.mxu0 0.0
          %601 = vmatpush1.msra.mxu0 0.0
          %602 = vmatprep.subr.mxu0 0.0
          %603 = vmatpush1.msra.mxu0 0.0
          %604 = vmatprep.subr.mxu0 0.0
          %605 = vmatpush1.msra.mxu0 0.0
          %606 = vmatprep.subr.mxu0 0.0
          %607 = vmatpush1.msra.mxu0 0.0
          %608 = vmatprep.subr.mxu0 0.0
          %609 = vmatpush1.msra.mxu0 0.0
          %610 = vmatprep.subr.mxu0 0.0
          %611 = vmatpush1.msra.mxu0 0.0
          %612 = vmatprep.subr.mxu0 0.0
          %613 = vmatpush1.msra.mxu0 0.0
          %614 = vmatprep.subr.mxu0 0.0
          %615 = vmatpush1.msra.mxu0 0.0
          %616 = vmatprep.subr.mxu0 0.0
          %617 = vmatpush1.msra.mxu0 0.0
          %618 = vmatprep.subr.mxu0 0.0
          %619 = vmatpush1.msra.mxu0 0.0
          %620 = vmatprep.subr.mxu0 0.0
          %621 = vmatpush1.msra.mxu0 0.0
          %622 = vmatprep.mubr.f32.mxu0 0.0
          %623 = vmatmul.mubr.f32.gmra.mrb[0].mxu0 %v556
          %v624 = vpop.f32.mrb[0].mxu0
          %v625 = vadd.f32 %v511, %v624
          %v626 = vpop.f32.mrb[0].mxu0
          %627 = vdwg.mxu0
          %vm628 = vcmask 24576
          %v629 = vsel %vm628, %v625, 0.0
          %630 = vadd.xlane.f32.xlu0 %v629
          %v631 = vpop.xlane.xlu0 %630
          %v632 = vrcp.pop 4.0
          %v633 = vmul.f32 %v631, %v632
          %v634 = vsub.f32 %v625, %v633
          %v635 = vmul.f32 %v634, %v634
          %v636 = vsel %vm628, %v635, 0.0
          %637 = vadd.xlane.f32.xlu0 %v636
          %v638 = vpop.xlane.xlu0 %637
          %v639 = vmul.f32 %v638, %v632
          %v640 = vadd.f32 %v639, 1e-05
          %v641 = vrsqrt.pop %v640
          %v642 = vmul.f32 %v634, %v641
          %v643 = vld [vmem:[%s4] sm:$0x1]
          %v644 = vmul.f32 %v642, %v643
          %v645 = vld [vmem:[%s5] sm:$0x1]
          %v646 = vadd.f32 %v644, %v645
          %v647 = vmax.f32 %v646, 0.0
          %v648 = vld [vmem:[%s6] sm:$0xf]
          %v649 = vld [vmem:[%s7] sm:$0x1]
          %vm650 = vcmask 31744
          %v652 = vsel %vm650, %v647, 0
          %vm654 = vcmask 1043456
          %v656 = vsel %vm654, %v648, 0
          %658 = vmatprep.subr.mxu0 0.0
          %659 = vmatpush1.msra.mxu0 %v656
          %660 = vmatprep.subr.mxu0 0.0
          %661 = vmatpush1.msra.mxu0 0.0
          %662 = vmatprep.subr.mxu0 0.0
          %663 = vmatpush1.msra.mxu0 0.0
          %664 = vmatprep.subr.mxu0 0.0
          %665 = vmatpush1.msra.mxu0 0.0
          %666 = vmatprep.subr.mxu0 0.0
          %667 = vmatpush1.msra.mxu0 0.0
          %668 = vmatprep.subr.mxu0 0.0
          %669 = vmatpush1.msra.mxu0 0.0
          %670 = vmatprep.subr.mxu0 0.0
          %671 = vmatpush1.msra.mxu0 0.0
          %672 = vmatprep.subr.mxu0 0.0
          %673 = vmatpush1.msra.mxu0 0.0
          %674 = vmatprep.subr.mxu0 0.0
          %675 = vmatpush1.msra.mxu0 0.0
          %676 = vmatprep.subr.mxu0 0.0
          %677 = vmatpush1.msra.mxu0 0.0
          %678 = vmatprep.subr.mxu0 0.0
          %679 = vmatpush1.msra.mxu0 0.0
          %680 = vmatprep.subr.mxu0 0.0
          %681 = vmatpush1.msra.mxu0 0.0
          %682 = vmatprep.subr.mxu0 0.0
          %683 = vmatpush1.msra.mxu0 0.0
          %684 = vmatprep.subr.mxu0 0.0
          %685 = vmatpush1.msra.mxu0 0.0
          %686 = vmatprep.subr.mxu0 0.0
          %687 = vmatpush1.msra.mxu0 0.0
          %688 = vmatprep.subr.mxu0 0.0
          %689 = vmatpush1.msra.mxu0 0.0
          %690 = vmatprep.subr.mxu0 0.0
          %691 = vmatpush1.msra.mxu0 0.0
          %692 = vmatprep.subr.mxu0 0.0
          %693 = vmatpush1.msra.mxu0 0.0
          %694 = vmatprep.subr.mxu0 0.0
          %695 = vmatpush1.msra.mxu0 0.0
          %696 = vmatprep.subr.mxu0 0.0
          %697 = vmatpush1.msra.mxu0 0.0
          %698 = vmatprep.subr.mxu0 0.0
          %699 = vmatpush1.msra.mxu0 0.0
          %700 = vmatprep.subr.mxu0 0.0
          %701 = vmatpush1.msra.mxu0 0.0
          %702 = vmatprep.subr.mxu0 0.0
          %703 = vmatpush1.msra.mxu0 0.0
          %704 = vmatprep.subr.mxu0 0.0
          %705 = vmatpush1.msra.mxu0 0.0
          %706 = vmatprep.subr.mxu0 0.0
          %707 = vmatpush1.msra.mxu0 0.0
          %708 = vmatprep.subr.mxu0 0.0
          %709 = vmatpush1.msra.mxu0 0.0
          %710 = vmatprep.subr.mxu0 0.0
          %711 = vmatpush1.msra.mxu0 0.0
          %712 = vmatprep.subr.mxu0 0.0
          %713 = vmatpush1.msra.mxu0 0.0
          %714 = vmatprep.subr.mxu0 0.0
          %715 = vmatpush1.msra.mxu0 0.0
          %716 = vmatprep.subr.mxu0 0.0
          %717 = vmatpush1.msra.mxu0 0.0
          %718 = vmatprep.subr.mxu0 0.0
          %719 = vmatpush1.msra.mxu0 0.0
          %720 = vmatprep.subr.mxu0 0.0
          %721 = vmatpush1.msra.mxu0 0.0
          %722 = vmatprep.mubr.f32.mxu0 0.0
          %723 = vmatmul.mubr.f32.gmra.mrb[0].mxu0 %v652
          %v724 = vpop.f32.mrb[0].mxu0
          %v725 = vadd.f32 %v649, %v724
          %v726 = vpop.f32.mrb[0].mxu0
          %727 = vdwg.mxu0
          %vm728 = vcmask 253952
          %729 = vst.msk [vmem:[%s338] sm:$0x1] %vm728, %v725
        $region64: #{tpu_custom_call.1} parent=51 // pred_fallthru
          _
        %s730 = sand.u32 %s220, 1
        %s731 = scalar_lea.sflag [#allocation7], %s730
        %s732 = sand.u32 %s220, 1
        %s733 = scalar_lea.vmem [#allocation8], %s732
        // Predicated region
        $region65: #{tpu_custom_call.1} parent=51 // pred_check
          %p734 = pneg %p230
        $region66: #{tpu_custom_call.1} parent=51 // pred_check_branch
          %736 = sbr.rel (%p734) target = $region68
        $region67: #{tpu_custom_call.1} parent=51 // pred_region
          %s738 = ssub.s32 16, 16
          %739 = vsyncadd %s731, %s738
          %s740 = smul.addr %s29, 16
          %s741 = scalar_lea.hbm %s8, %s740
          %s743 = sshll.u32 %s733, 4
          %s744 = int_to_ptr.vmem [resolvable:$true] %s743
          %746 = dma.vmem_to_hbm [thread:$0]  %s744, 16, %s741, %s731
        $region68: #{tpu_custom_call.1} parent=51 // pred_fallthru
          _
      $region52: #{tpu_custom_call.1} parent=5 // pred_fallthru
        _
      %p747 = scmp.le.s32.totalorder 2, %s20
      // Predicated region
      $region69: #{tpu_custom_call.1} parent=5 // pred_check
        %p748 = pneg %p747
      $region70: #{tpu_custom_call.1} parent=5 // pred_check_branch
        %750 = sbr.rel (%p748) target = $region72
      $region71: #{tpu_custom_call.1} parent=5 // pred_region
        %s751 = ssub.s32 %s20, 2
        // Predicated region
        $region73: #{tpu_custom_call.1} parent=71 // pred_check
          %p752 = pneg %p236
        $region74: #{tpu_custom_call.1} parent=71 // pred_check_branch
          %754 = sbr.rel (%p752) target = $region76
        $region75: #{tpu_custom_call.1} parent=71 // pred_region
          %s755 = sand.u32 %s221, 1
          %s756 = scalar_lea.sflag [#allocation7], %s755
          %s757 = sand.u32 %s221, 1
          %s758 = scalar_lea.vmem [#allocation8], %s757
          %759 = dma.done %s756, 16
        $region76: #{tpu_custom_call.1} parent=71 // pred_fallthru
          _
      $region72: #{tpu_custom_call.1} parent=5 // pred_fallthru
        _
    $region6: #{tpu_custom_call.1} parent=1 // loop_footer
      %s24 = sadd.s32 1, %s20
    $region7: #{tpu_custom_call.1} parent=1 // loop_footer_branch
      %19 = sbr.rel target = $region3
    $region8: #{tpu_custom_call.1} parent=1 // loop_exit
      _
    %760 = vsyncpa [#allocation6], 1
    %s761 = scalar_lea.sflag [#allocation6], 1
    %762 = vsyncpa %s761, 1
    %763 = vsyncpa [#allocation7], 1
    %s764 = scalar_lea.sflag [#allocation7], 1
    %765 = vsyncpa %s764, 1

</llo_original>
